<compile_context>
chip_gen: v6e
topology: v6e:2x2x1
jax: 0.10.0
libtpu: 0.0.40
codegen_flags: <defaults>
</compile_context>

<pallas_src>
import jax
import jax.numpy as jnp
from jax.experimental import pallas as pl
from jax.experimental.pallas import tpu as pltpu


def _h_swish_kernel(x_ref, o_ref):
    x = x_ref[...]
    # h_sigmoid(x) = relu6(x + 3) / 6 ; h_swish(x) = x * h_sigmoid(x)
    hs = jnp.clip(x + 3.0, 0.0, 6.0) * (1.0 / 6.0)
    o_ref[...] = (x * hs).astype(o_ref.dtype)


def _h_swish_jnp(x):
    # Fused-XLA fallback for tiny tensors / ragged tails.
    return (x * (jnp.clip(x + 3.0, 0.0, 6.0) * (1.0 / 6.0))).astype(x.dtype)


_LANE_CANDIDATES = (4096, 2048, 1024, 512, 256, 128)
_MIN_GRID_STEPS = 4                       # keep the DMA pipeline + both v7x TCs busy
_DEFAULT_BLOCK_BYTES = 8 * 1024 * 1024    # ~8 MiB per block
_VMEM_LIMIT_BYTES = 48 * 1024 * 1024      # 4 x 8 MiB double-buffered + headroom (< 64 MiB v7x)
_MIN_PALLAS_ELEMS = 256 * 1024            # below this, launch overhead dominates


def _round_up(n, m):
    return ((n + m - 1) // m) * m


def _h_swish_2d(x2d, *, target_block_bytes):
    """Run the Pallas kernel over a lane-dense (rows, width) slab."""
    rows, width = x2d.shape
    itemsize = jnp.dtype(x2d.dtype).itemsize
    # Sublane packing: 8 rows/vreg for 32-bit, 16 for 16-bit, 32 for 8-bit.
    sublane_pack = 8 * max(1, 4 // itemsize)

    # Choose the number of grid steps first: enough blocks to software-pipeline
    # (>= _MIN_GRID_STEPS) and an even count so both v7x TensorCores get
    # balanced work; block size stays at or below ~target_block_bytes.
    total_bytes = rows * width * itemsize
    steps = max(_MIN_GRID_STEPS, pl.cdiv(total_bytes, target_block_bytes))
    if steps % 2:
        steps += 1
    tr = max(sublane_pack, _round_up(pl.cdiv(rows, steps), sublane_pack))
    tr = min(tr, rows)                    # full-extent block is always legal
    grid = (pl.cdiv(rows, tr),)           # boundary block (if any) is masked

    return pl.pallas_call(
        _h_swish_kernel,
        out_shape=jax.ShapeDtypeStruct((rows, width), x2d.dtype),
        grid_spec=pl.GridSpec(
            grid=grid,
            in_specs=[pl.BlockSpec((tr, width), lambda i: (i, 0))],
            out_specs=pl.BlockSpec((tr, width), lambda i: (i, 0)),
        ),
        compiler_params=pltpu.CompilerParams(
            dimension_semantics=("parallel",),   # megacore sharding on v7x
            vmem_limit_bytes=_VMEM_LIMIT_BYTES,
        ),
        cost_estimate=pl.CostEstimate(
            flops=5 * rows * width,
            transcendentals=0,
            bytes_accessed=2 * rows * width * itemsize,
        ),
    )(x2d)


def h_swish(x: jax.Array, *, target_block_bytes: int = _DEFAULT_BLOCK_BYTES,
            min_pallas_elems: int = _MIN_PALLAS_ELEMS) -> jax.Array:
    """Elementwise hard-swish on an arbitrary-shape tensor (NCHW expected)."""
    orig_shape = x.shape
    total = x.size

    # Tiny tensors: the fused XLA elementwise op beats pallas_call overhead.
    if total < min_pallas_elems:
        return _h_swish_jnp(x)

    # Widest lane-dense width (multiple of 128) that divides the element count
    # -> zero-copy reshape, long unmasked DMA streams.
    width = None
    for w in _LANE_CANDIDATES:
        if total % w == 0:
            width = w
            break

    if width is not None:
        out2d = _h_swish_2d(x.reshape(total // width, width),
                            target_block_bytes=target_block_bytes)
        return out2d.reshape(orig_shape)

    # Awkward element count (not a multiple of 128, rare for NCHW): keep the
    # widest slab for the 128-aligned prefix and compute the < width-element
    # tail with plain jnp.  No full-tensor pad pass and no degradation to a
    # 128-wide slab.
    for w in _LANE_CANDIDATES:
        if total >= 8 * w:
            width = w
            break
    if width is None:        # extremely small forced-kernel inputs: just fuse
        return _h_swish_jnp(x)

    main = (total // width) * width
    x_flat = x.reshape(-1)
    main_out = _h_swish_2d(x_flat[:main].reshape(main // width, width),
                           target_block_bytes=target_block_bytes)
    tail_out = _h_swish_jnp(x_flat[main:])
    return jnp.concatenate([main_out.reshape(-1), tail_out]).reshape(orig_shape)


def _h_swish_ref(x):
    return x * (jnp.clip(x + 3.0, 0.0, 6.0) / 6.0)


if __name__ == "__main__":
    key = jax.random.PRNGKey(0)
    k1, k2, k3 = jax.random.split(key, 3)

    # 1) Module-spec NCHW shape -- small, takes the fused-XLA fast path.
    x1 = jax.random.normal(k1, (2, 4, 16, 16), dtype=jnp.float32)
    o1 = jax.block_until_ready(h_swish(x1))
    assert o1.shape == x1.shape and o1.dtype == x1.dtype
    assert jnp.allclose(o1, _h_swish_ref(x1), atol=1e-6, rtol=1e-6)

    # 2) Large enough to take the Pallas path (width=4096, 4 even grid steps).
    x2 = jax.random.normal(k2, (4, 16, 64, 64), dtype=jnp.float32)
    o2 = jax.block_until_ready(h_swish(x2))
    assert o2.shape == x2.shape and o2.dtype == x2.dtype
    assert jnp.allclose(o2, _h_swish_ref(x2), atol=1e-6, rtol=1e-6)

    # 3) Awkward element count (not a multiple of 128): prefix kernel + jnp tail.
    x3 = jax.random.normal(k3, (3, 5, 61, 53), dtype=jnp.float32)
    o3 = jax.block_until_ready(h_swish(x3, min_pallas_elems=0))
    assert o3.shape == x3.shape and o3.dtype == x3.dtype
    assert jnp.allclose(o3, _h_swish_ref(x3), atol=1e-6, rtol=1e-6)

    print("KERNEL_OK")
</pallas_src>

<mosaic_0001>
module attributes {stable_mosaic.version = 11 : i64} {
  func.func @_h_swish_kernel(%arg0: i32, %arg1: memref<16x4096xf32, #tpu.memory_space<vmem>>, %arg2: memref<16x4096xf32, #tpu.memory_space<vmem>>) attributes {dimension_semantics = [#tpu.dimension_semantics<parallel>], iteration_bounds = array<i64: 4>, scalar_prefetch = 0 : i64, scratch_operands = 0 : i64, tpu.core_type = #tpu.core_type<tc>, window_params = [{transform_indices = @transform_0, window_bounds = array<i64: 16, 4096>}, {transform_indices = @transform_1, window_bounds = array<i64: 16, 4096>}]} {
    %c0 = arith.constant 0 : index
    %c0_0 = arith.constant 0 : index
    %0 = vector.load %arg1[%c0, %c0_0] : memref<16x4096xf32, #tpu.memory_space<vmem>>, vector<16x4096xf32>
    %cst = arith.constant 3.000000e+00 : f32
    %1 = vector.broadcast %cst : f32 to vector<16x4096xf32>
    %2 = arith.addf %0, %1 : vector<16x4096xf32>
    %cst_1 = arith.constant 0.000000e+00 : f32
    %cst_2 = arith.constant 6.000000e+00 : f32
    %3 = vector.broadcast %cst_1 : f32 to vector<16x4096xf32>
    %4 = arith.maximumf %3, %2 : vector<16x4096xf32>
    %5 = vector.broadcast %cst_2 : f32 to vector<16x4096xf32>
    %6 = arith.minimumf %5, %4 : vector<16x4096xf32>
    %cst_3 = arith.constant 0.166666672 : f32
    %7 = vector.broadcast %cst_3 : f32 to vector<16x4096xf32>
    %8 = arith.mulf %6, %7 : vector<16x4096xf32>
    %9 = arith.mulf %0, %8 : vector<16x4096xf32>
    %c0_4 = arith.constant 0 : index
    %c0_5 = arith.constant 0 : index
    %10 = vector.load %arg2[%c0_4, %c0_5] : memref<16x4096xf32, #tpu.memory_space<vmem>>, vector<16x4096xf32>
    tpu.vector_store %arg2[%c0_4, %c0_5], %9 {strides = array<i32>} : memref<16x4096xf32, #tpu.memory_space<vmem>>, vector<16x4096xf32>,
    return
  }
  func.func @transform_0(%arg0: i32) -> (i32, i32) {
    %c0_i32 = arith.constant 0 : i32
    %c0_i32_0 = arith.constant 0 : i32
    return %arg0, %c0_i32 : i32, i32
  }
  func.func @transform_1(%arg0: i32) -> (i32, i32) {
    %c0_i32 = arith.constant 0 : i32
    %c0_i32_0 = arith.constant 0 : i32
    return %arg0, %c0_i32 : i32, i32
  }
}

</mosaic_0001>

<llo_original>
// kernel: tpu_custom_call.1
$region0: #{tpu_custom_call.1}
  #allocation0 [shape = 'u32[]', space=smem, size = 0x4, offset = 0x4, fixed_abs, tag = 'smem constant byte address 0x4 - core index']
  #allocation1 [shape = 'u32[144,128]{1,0:T(1,128)}', space=vmem, size = 0x12000, scoped, tag = 'internal scratch']
  %s0 = inlined_call_operand.hbm [shape: f32[64,4096], index: 0, kind: input, shape index: {}]
  %s1 = inlined_call_operand.hbm [shape: f32[64,4096], index: 1, kind: output, shape index: {}]
  %s2 = sld [smem:[#allocation0]]
  $region41: #{tpu_custom_call.1} parent=0
    _
  %s4 = ssub.s32 1, %s2
  %s5 = scalar_select 0, %s4, %s2
  $region1: #{tpu_custom_call.1} parent=0
    #allocation2 [shape = 'u8[524288]{0}', space=vmem, size = 0x80000, scoped, tag = 'input window, operand 0']
    #allocation3 [shape = 's32[2]{0}', space=sflag, size = 0x8, scoped, tag = 'scoped memory for tpu_custom_call.1']
    #allocation4 [shape = 's32[2]{0}', space=sflag, size = 0x8, scoped, tag = 'scoped memory for tpu_custom_call.1']
    #allocation5 [shape = 'u8[524288]{0}', space=vmem, size = 0x80000, scoped, tag = 'output window, operand 0']
    %6 = vsyncpa [#allocation3], 0
    %s7 = scalar_lea.sflag [#allocation3], 1
    %8 = vsyncpa %s7, 0
    %9 = vsyncpa [#allocation4], 0
    %s10 = scalar_lea.sflag [#allocation4], 1
    %11 = vsyncpa %s10, 0
    loop: start=0, step=1, limit=6
    $region2: #{tpu_custom_call.1} parent=1 // loop_pre_header
      _
    $region3: #{tpu_custom_call.1} parent=1 // loop_header
      %s13 = sphi 0, %s17
      %p14 = scmp.ge.s32.totalorder %s13, 6
      %s23 = sphi 0, %s25
      %s26 = sphi 0, %s23
      %s27 = sphi 0, %s26
      %s43 = sphi 0, %s27
      %s49 = sphi 0, %s51
      %s52 = sphi 0, %s49
      %s53 = sphi 0, %s52
      %s69 = sphi 0, %s53
    $region4: #{tpu_custom_call.1} parent=1 // loop_header_branch
      %16 = sbr.rel (%p14) target = $region8
    $region5: #{tpu_custom_call.1} parent=1 // loop_body
      %s18 = ssub.s32 %s13, 1
      %s19 = ssub.s32 %s13, 2
      %s20 = sadd.s32 %s13, 1
      %s21 = ssub.s32 %s13, %s20
      %p22 = scmp.eq.s32.totalorder %s21, 0
      %s24 = sadd.s32 %s23, 1
      %s25 = scalar_select %p22, %s23, %s24
      %p28 = pneg %p22
      %p29 = scmp.eq.s32.totalorder %s13, 3
      %p30 = por %p28, %p29
      %p31 = scmp.ne.s32.totalorder %s23, %s26
      %p32 = scmp.eq.s32.totalorder %s13, 0
      %p33 = por %p31, %p32
      %p34 = scmp.ne.s32.totalorder %s23, %s26
      %p35 = scmp.eq.s32.totalorder %s18, 3
      %p36 = por %p34, %p35
      %p37 = scmp.ne.s32.totalorder %s26, %s27
      %p38 = scmp.eq.s32.totalorder %s18, 0
      %p39 = por %p37, %p38
      %p40 = scmp.ne.s32.totalorder %s26, %s27
      %p41 = scmp.eq.s32.totalorder %s19, 3
      %p42 = por %p40, %p41
      %p44 = scmp.ne.s32.totalorder %s27, %s43
      %p45 = scmp.eq.s32.totalorder %s19, 0
      %p46 = por %p44, %p45
      %s47 = ssub.s32 %s13, %s20
      %p48 = scmp.eq.s32.totalorder %s47, 0
      %s50 = sadd.s32 %s49, 1
      %s51 = scalar_select %p48, %s49, %s50
      %p54 = pneg %p48
      %p55 = scmp.eq.s32.totalorder %s13, 3
      %p56 = por %p54, %p55
      %p57 = scmp.ne.s32.totalorder %s49, %s52
      %p58 = scmp.eq.s32.totalorder %s13, 0
      %p59 = por %p57, %p58
      %p60 = scmp.ne.s32.totalorder %s49, %s52
      %p61 = scmp.eq.s32.totalorder %s18, 3
      %p62 = por %p60, %p61
      %p63 = scmp.ne.s32.totalorder %s52, %s53
      %p64 = scmp.eq.s32.totalorder %s18, 0
      %p65 = por %p63, %p64
      %p66 = scmp.ne.s32.totalorder %s52, %s53
      %p67 = scmp.eq.s32.totalorder %s19, 3
      %p68 = por %p66, %p67
      %p70 = scmp.ne.s32.totalorder %s53, %s69
      %p71 = scmp.eq.s32.totalorder %s19, 0
      %p72 = por %p70, %p71
      %p73 = scmp.le.s32.totalorder 1, %s13
      %p74 = scmp.lt.s32.totalorder %s13, 5
      %p75 = pnand %p73, %p74
      %p76 = pneg %p75
      // Predicated region
      $region9: #{tpu_custom_call.1} parent=5 // pred_check
        _
      $region10: #{tpu_custom_call.1} parent=5 // pred_check_branch
        %78 = sbr.rel (%p75) target = $region12
      $region11: #{tpu_custom_call.1} parent=5 // pred_region
        %s79 = ssub.s32 %s13, 1
      $region12: #{tpu_custom_call.1} parent=5 // pred_fallthru
        _
      %p80 = scmp.lt.s32.totalorder %s13, 4
      // Predicated region
      $region13: #{tpu_custom_call.1} parent=5 // pred_check
        %p81 = pneg %p80
      $region14: #{tpu_custom_call.1} parent=5 // pred_check_branch
        %83 = sbr.rel (%p81) target = $region16
      $region15: #{tpu_custom_call.1} parent=5 // pred_region
        // Predicated region
        $region17: #{tpu_custom_call.1} parent=15 // pred_check
          %p84 = pneg %p33
        $region18: #{tpu_custom_call.1} parent=15 // pred_check_branch
          %86 = sbr.rel (%p84) target = $region20
        $region19: #{tpu_custom_call.1} parent=15 // pred_region
          %s87 = sand.u32 %s23, 1
          %s88 = scalar_lea.sflag [#allocation3], %s87
          %s89 = sand.u32 %s23, 1
          %s90 = smul.addr %s89, 512
          %s91 = scalar_lea.vmem [#allocation2], %s90
          %s92 = smul.u32 2, %s13
          %s94 = ssub.s32 8192, 8192
          %95 = vsyncadd %s88, %s94
          %s96 = smul.addr %s92, 32
          %s97 = smul.addr %s96, 128
          %s98 = scalar_lea.hbm %s0, %s97
          %s99 = sshll.u32 %s91, 4
          %s100 = int_to_ptr.vmem [resolvable:$true] %s99
          %105 = dma.hbm_to_vmem [thread:$0]  %s98, 8192, %s100, %s88, 4096, 4096, 256
        $region20: #{tpu_custom_call.1} parent=15 // pred_fallthru
          _
      $region16: #{tpu_custom_call.1} parent=5 // pred_fallthru
        _
      %p106 = scmp.le.s32.totalorder 1, %s13
      %p107 = scmp.lt.s32.totalorder %s13, 5
      %p108 = pnand %p106, %p107
      %p109 = pneg %p108
      // Predicated region
      $region21: #{tpu_custom_call.1} parent=5 // pred_check
        _
      $region22: #{tpu_custom_call.1} parent=5 // pred_check_branch
        %111 = sbr.rel (%p108) target = $region24
      $region23: #{tpu_custom_call.1} parent=5 // pred_region
        %s112 = ssub.s32 %s13, 1
        %s113 = sand.u32 %s26, 1
        %s114 = scalar_lea.sflag [#allocation3], %s113
        %s115 = sand.u32 %s26, 1
        %s116 = smul.addr %s115, 512
        %s117 = scalar_lea.vmem [#allocation2], %s116
        // Predicated region
        $region25: #{tpu_custom_call.1} parent=23 // pred_check
          %p118 = pneg %p39
        $region26: #{tpu_custom_call.1} parent=23 // pred_check_branch
          %120 = sbr.rel (%p118) target = $region28
        $region27: #{tpu_custom_call.1} parent=23 // pred_region
          %121 = dma.done %s114, 8192
        $region28: #{tpu_custom_call.1} parent=23 // pred_fallthru
          _
        %s122 = sand.u32 %s26, 1
        %s123 = scalar_lea.sflag [#allocation3], %s122
        %s124 = sand.u32 %s26, 1
        %s125 = smul.addr %s124, 512
        %s126 = scalar_lea.vmem [#allocation2], %s125
        %p127 = pneg %p39
        %p128 = pneg %p36
        %p129 = pneg %p65
        %p130 = pneg %p62
        %s131 = sand.u32 %s52, 1
        %s132 = scalar_lea.sflag [#allocation4], %s131
        %s133 = sand.u32 %s52, 1
        %s134 = smul.addr %s133, 512
        %s135 = scalar_lea.vmem [#allocation5], %s134
        %s136 = smul.u32 2, %s18
        %s137 = smul.u32 2, %s18
        %v138 = vld [vmem:[%s117] sm:$0xff]
        %v139 = vld [vmem:[%s117 + $0x8] sm:$0xff]
        %v140 = vld [vmem:[%s117 + $0x10] sm:$0xff]
        %v141 = vld [vmem:[%s117 + $0x18] sm:$0xff]
        %v142 = vld [vmem:[%s117 + $0x20] sm:$0xff]
        %v143 = vld [vmem:[%s117 + $0x28] sm:$0xff]
        %v144 = vld [vmem:[%s117 + $0x30] sm:$0xff]
        %v145 = vld [vmem:[%s117 + $0x38] sm:$0xff]
        %v146 = vld [vmem:[%s117 + $0x40] sm:$0xff]
        %v147 = vld [vmem:[%s117 + $0x48] sm:$0xff]
        %v148 = vld [vmem:[%s117 + $0x50] sm:$0xff]
        %v149 = vld [vmem:[%s117 + $0x58] sm:$0xff]
        %v150 = vld [vmem:[%s117 + $0x60] sm:$0xff]
        %v151 = vld [vmem:[%s117 + $0x68] sm:$0xff]
        %v152 = vld [vmem:[%s117 + $0x70] sm:$0xff]
        %v153 = vld [vmem:[%s117 + $0x78] sm:$0xff]
        %v154 = vld [vmem:[%s117 + $0x80] sm:$0xff]
        %v155 = vld [vmem:[%s117 + $0x88] sm:$0xff]
        %v156 = vld [vmem:[%s117 + $0x90] sm:$0xff]
        %v157 = vld [vmem:[%s117 + $0x98] sm:$0xff]
        %v158 = vld [vmem:[%s117 + $0xa0] sm:$0xff]
        %v159 = vld [vmem:[%s117 + $0xa8] sm:$0xff]
        %v160 = vld [vmem:[%s117 + $0xb0] sm:$0xff]
        %v161 = vld [vmem:[%s117 + $0xb8] sm:$0xff]
        %v162 = vld [vmem:[%s117 + $0xc0] sm:$0xff]
        %v163 = vld [vmem:[%s117 + $0xc8] sm:$0xff]
        %v164 = vld [vmem:[%s117 + $0xd0] sm:$0xff]
        %v165 = vld [vmem:[%s117 + $0xd8] sm:$0xff]
        %v166 = vld [vmem:[%s117 + $0xe0] sm:$0xff]
        %v167 = vld [vmem:[%s117 + $0xe8] sm:$0xff]
        %v168 = vld [vmem:[%s117 + $0xf0] sm:$0xff]
        %v169 = vld [vmem:[%s117 + $0xf8] sm:$0xff]
        %v170 = vld [vmem:[%s117 + $0x100] sm:$0xff]
        %v171 = vld [vmem:[%s117 + $0x108] sm:$0xff]
        %v172 = vld [vmem:[%s117 + $0x110] sm:$0xff]
        %v173 = vld [vmem:[%s117 + $0x118] sm:$0xff]
        %v174 = vld [vmem:[%s117 + $0x120] sm:$0xff]
        %v175 = vld [vmem:[%s117 + $0x128] sm:$0xff]
        %v176 = vld [vmem:[%s117 + $0x130] sm:$0xff]
        %v177 = vld [vmem:[%s117 + $0x138] sm:$0xff]
        %v178 = vld [vmem:[%s117 + $0x140] sm:$0xff]
        %v179 = vld [vmem:[%s117 + $0x148] sm:$0xff]
        %v180 = vld [vmem:[%s117 + $0x150] sm:$0xff]
        %v181 = vld [vmem:[%s117 + $0x158] sm:$0xff]
        %v182 = vld [vmem:[%s117 + $0x160] sm:$0xff]
        %v183 = vld [vmem:[%s117 + $0x168] sm:$0xff]
        %v184 = vld [vmem:[%s117 + $0x170] sm:$0xff]
        %v185 = vld [vmem:[%s117 + $0x178] sm:$0xff]
        %v186 = vld [vmem:[%s117 + $0x180] sm:$0xff]
        %v187 = vld [vmem:[%s117 + $0x188] sm:$0xff]
        %v188 = vld [vmem:[%s117 + $0x190] sm:$0xff]
        %v189 = vld [vmem:[%s117 + $0x198] sm:$0xff]
        %v190 = vld [vmem:[%s117 + $0x1a0] sm:$0xff]
        %v191 = vld [vmem:[%s117 + $0x1a8] sm:$0xff]
        %v192 = vld [vmem:[%s117 + $0x1b0] sm:$0xff]
        %v193 = vld [vmem:[%s117 + $0x1b8] sm:$0xff]
        %v194 = vld [vmem:[%s117 + $0x1c0] sm:$0xff]
        %v195 = vld [vmem:[%s117 + $0x1c8] sm:$0xff]
        %v196 = vld [vmem:[%s117 + $0x1d0] sm:$0xff]
        %v197 = vld [vmem:[%s117 + $0x1d8] sm:$0xff]
        %v198 = vld [vmem:[%s117 + $0x1e0] sm:$0xff]
        %v199 = vld [vmem:[%s117 + $0x1e8] sm:$0xff]
        %v200 = vld [vmem:[%s117 + $0x1f0] sm:$0xff]
        %v201 = vld [vmem:[%s117 + $0x1f8] sm:$0xff]
        %v202 = vadd.f32 %v138, 3.0
        %v203 = vadd.f32 %v139, 3.0
        %v204 = vadd.f32 %v140, 3.0
        %v205 = vadd.f32 %v141, 3.0
        %v206 = vadd.f32 %v142, 3.0
        %v207 = vadd.f32 %v143, 3.0
        %v208 = vadd.f32 %v144, 3.0
        %v209 = vadd.f32 %v145, 3.0
        %v210 = vadd.f32 %v146, 3.0
        %v211 = vadd.f32 %v147, 3.0
        %v212 = vadd.f32 %v148, 3.0
        %v213 = vadd.f32 %v149, 3.0
        %v214 = vadd.f32 %v150, 3.0
        %v215 = vadd.f32 %v151, 3.0
        %v216 = vadd.f32 %v152, 3.0
        %v217 = vadd.f32 %v153, 3.0
        %v218 = vadd.f32 %v154, 3.0
        %v219 = vadd.f32 %v155, 3.0
        %v220 = vadd.f32 %v156, 3.0
        %v221 = vadd.f32 %v157, 3.0
        %v222 = vadd.f32 %v158, 3.0
        %v223 = vadd.f32 %v159, 3.0
        %v224 = vadd.f32 %v160, 3.0
        %v225 = vadd.f32 %v161, 3.0
        %v226 = vadd.f32 %v162, 3.0
        %v227 = vadd.f32 %v163, 3.0
        %v228 = vadd.f32 %v164, 3.0
        %v229 = vadd.f32 %v165, 3.0
        %v230 = vadd.f32 %v166, 3.0
        %v231 = vadd.f32 %v167, 3.0
        %v232 = vadd.f32 %v168, 3.0
        %v233 = vadd.f32 %v169, 3.0
        %v234 = vadd.f32 %v170, 3.0
        %v235 = vadd.f32 %v171, 3.0
        %v236 = vadd.f32 %v172, 3.0
        %v237 = vadd.f32 %v173, 3.0
        %v238 = vadd.f32 %v174, 3.0
        %v239 = vadd.f32 %v175, 3.0
        %v240 = vadd.f32 %v176, 3.0
        %v241 = vadd.f32 %v177, 3.0
        %v242 = vadd.f32 %v178, 3.0
        %v243 = vadd.f32 %v179, 3.0
        %v244 = vadd.f32 %v180, 3.0
        %v245 = vadd.f32 %v181, 3.0
        %v246 = vadd.f32 %v182, 3.0
        %v247 = vadd.f32 %v183, 3.0
        %v248 = vadd.f32 %v184, 3.0
        %v249 = vadd.f32 %v185, 3.0
        %v250 = vadd.f32 %v186, 3.0
        %v251 = vadd.f32 %v187, 3.0
        %v252 = vadd.f32 %v188, 3.0
        %v253 = vadd.f32 %v189, 3.0
        %v254 = vadd.f32 %v190, 3.0
        %v255 = vadd.f32 %v191, 3.0
        %v256 = vadd.f32 %v192, 3.0
        %v257 = vadd.f32 %v193, 3.0
        %v258 = vadd.f32 %v194, 3.0
        %v259 = vadd.f32 %v195, 3.0
        %v260 = vadd.f32 %v196, 3.0
        %v261 = vadd.f32 %v197, 3.0
        %v262 = vadd.f32 %v198, 3.0
        %v263 = vadd.f32 %v199, 3.0
        %v264 = vadd.f32 %v200, 3.0
        %v265 = vadd.f32 %v201, 3.0
        %v266 = vmax.f32 %v202, 0.0
        %v267 = vmax.f32 %v203, 0.0
        %v268 = vmax.f32 %v204, 0.0
        %v269 = vmax.f32 %v205, 0.0
        %v270 = vmax.f32 %v206, 0.0
        %v271 = vmax.f32 %v207, 0.0
        %v272 = vmax.f32 %v208, 0.0
        %v273 = vmax.f32 %v209, 0.0
        %v274 = vmax.f32 %v210, 0.0
        %v275 = vmax.f32 %v211, 0.0
        %v276 = vmax.f32 %v212, 0.0
        %v277 = vmax.f32 %v213, 0.0
        %v278 = vmax.f32 %v214, 0.0
        %v279 = vmax.f32 %v215, 0.0
        %v280 = vmax.f32 %v216, 0.0
        %v281 = vmax.f32 %v217, 0.0
        %v282 = vmax.f32 %v218, 0.0
        %v283 = vmax.f32 %v219, 0.0
        %v284 = vmax.f32 %v220, 0.0
        %v285 = vmax.f32 %v221, 0.0
        %v286 = vmax.f32 %v222, 0.0
        %v287 = vmax.f32 %v223, 0.0
        %v288 = vmax.f32 %v224, 0.0
        %v289 = vmax.f32 %v225, 0.0
        %v290 = vmax.f32 %v226, 0.0
        %v291 = vmax.f32 %v227, 0.0
        %v292 = vmax.f32 %v228, 0.0
        %v293 = vmax.f32 %v229, 0.0
        %v294 = vmax.f32 %v230, 0.0
        %v295 = vmax.f32 %v231, 0.0
        %v296 = vmax.f32 %v232, 0.0
        %v297 = vmax.f32 %v233, 0.0
        %v298 = vmax.f32 %v234, 0.0
        %v299 = vmax.f32 %v235, 0.0
        %v300 = vmax.f32 %v236, 0.0
        %v301 = vmax.f32 %v237, 0.0
        %v302 = vmax.f32 %v238, 0.0
        %v303 = vmax.f32 %v239, 0.0
        %v304 = vmax.f32 %v240, 0.0
        %v305 = vmax.f32 %v241, 0.0
        %v306 = vmax.f32 %v242, 0.0
        %v307 = vmax.f32 %v243, 0.0
        %v308 = vmax.f32 %v244, 0.0
        %v309 = vmax.f32 %v245, 0.0
        %v310 = vmax.f32 %v246, 0.0
        %v311 = vmax.f32 %v247, 0.0
        %v312 = vmax.f32 %v248, 0.0
        %v313 = vmax.f32 %v249, 0.0
        %v314 = vmax.f32 %v250, 0.0
        %v315 = vmax.f32 %v251, 0.0
        %v316 = vmax.f32 %v252, 0.0
        %v317 = vmax.f32 %v253, 0.0
        %v318 = vmax.f32 %v254, 0.0
        %v319 = vmax.f32 %v255, 0.0
        %v320 = vmax.f32 %v256, 0.0
        %v321 = vmax.f32 %v257, 0.0
        %v322 = vmax.f32 %v258, 0.0
        %v323 = vmax.f32 %v259, 0.0
        %v324 = vmax.f32 %v260, 0.0
        %v325 = vmax.f32 %v261, 0.0
        %v326 = vmax.f32 %v262, 0.0
        %v327 = vmax.f32 %v263, 0.0
        %v328 = vmax.f32 %v264, 0.0
        %v329 = vmax.f32 %v265, 0.0
        %v330 = vmin.f32 %v266, 6.0
        %v331 = vmin.f32 %v267, 6.0
        %v332 = vmin.f32 %v268, 6.0
        %v333 = vmin.f32 %v269, 6.0
        %v334 = vmin.f32 %v270, 6.0
        %v335 = vmin.f32 %v271, 6.0
        %v336 = vmin.f32 %v272, 6.0
        %v337 = vmin.f32 %v273, 6.0
        %v338 = vmin.f32 %v274, 6.0
        %v339 = vmin.f32 %v275, 6.0
        %v340 = vmin.f32 %v276, 6.0
        %v341 = vmin.f32 %v277, 6.0
        %v342 = vmin.f32 %v278, 6.0
        %v343 = vmin.f32 %v279, 6.0
        %v344 = vmin.f32 %v280, 6.0
        %v345 = vmin.f32 %v281, 6.0
        %v346 = vmin.f32 %v282, 6.0
        %v347 = vmin.f32 %v283, 6.0
        %v348 = vmin.f32 %v284, 6.0
        %v349 = vmin.f32 %v285, 6.0
        %v350 = vmin.f32 %v286, 6.0
        %v351 = vmin.f32 %v287, 6.0
        %v352 = vmin.f32 %v288, 6.0
        %v353 = vmin.f32 %v289, 6.0
        %v354 = vmin.f32 %v290, 6.0
        %v355 = vmin.f32 %v291, 6.0
        %v356 = vmin.f32 %v292, 6.0
        %v357 = vmin.f32 %v293, 6.0
        %v358 = vmin.f32 %v294, 6.0
        %v359 = vmin.f32 %v295, 6.0
        %v360 = vmin.f32 %v296, 6.0
        %v361 = vmin.f32 %v297, 6.0
        %v362 = vmin.f32 %v298, 6.0
        %v363 = vmin.f32 %v299, 6.0
        %v364 = vmin.f32 %v300, 6.0
        %v365 = vmin.f32 %v301, 6.0
        %v366 = vmin.f32 %v302, 6.0
        %v367 = vmin.f32 %v303, 6.0
        %v368 = vmin.f32 %v304, 6.0
        %v369 = vmin.f32 %v305, 6.0
        %v370 = vmin.f32 %v306, 6.0
        %v371 = vmin.f32 %v307, 6.0
        %v372 = vmin.f32 %v308, 6.0
        %v373 = vmin.f32 %v309, 6.0
        %v374 = vmin.f32 %v310, 6.0
        %v375 = vmin.f32 %v311, 6.0
        %v376 = vmin.f32 %v312, 6.0
        %v377 = vmin.f32 %v313, 6.0
        %v378 = vmin.f32 %v314, 6.0
        %v379 = vmin.f32 %v315, 6.0
        %v380 = vmin.f32 %v316, 6.0
        %v381 = vmin.f32 %v317, 6.0
        %v382 = vmin.f32 %v318, 6.0
        %v383 = vmin.f32 %v319, 6.0
        %v384 = vmin.f32 %v320, 6.0
        %v385 = vmin.f32 %v321, 6.0
        %v386 = vmin.f32 %v322, 6.0
        %v387 = vmin.f32 %v323, 6.0
        %v388 = vmin.f32 %v324, 6.0
        %v389 = vmin.f32 %v325, 6.0
        %v390 = vmin.f32 %v326, 6.0
        %v391 = vmin.f32 %v327, 6.0
        %v392 = vmin.f32 %v328, 6.0
        %v393 = vmin.f32 %v329, 6.0
        %v394 = vmul.f32 %v330, 0.16666667
        %v395 = vmul.f32 %v331, 0.16666667
        %v396 = vmul.f32 %v332, 0.16666667
        %v397 = vmul.f32 %v333, 0.16666667
        %v398 = vmul.f32 %v334, 0.16666667
        %v399 = vmul.f32 %v335, 0.16666667
        %v400 = vmul.f32 %v336, 0.16666667
        %v401 = vmul.f32 %v337, 0.16666667
        %v402 = vmul.f32 %v338, 0.16666667
        %v403 = vmul.f32 %v339, 0.16666667
        %v404 = vmul.f32 %v340, 0.16666667
        %v405 = vmul.f32 %v341, 0.16666667
        %v406 = vmul.f32 %v342, 0.16666667
        %v407 = vmul.f32 %v343, 0.16666667
        %v408 = vmul.f32 %v344, 0.16666667
        %v409 = vmul.f32 %v345, 0.16666667
        %v410 = vmul.f32 %v346, 0.16666667
        %v411 = vmul.f32 %v347, 0.16666667
        %v412 = vmul.f32 %v348, 0.16666667
        %v413 = vmul.f32 %v349, 0.16666667
        %v414 = vmul.f32 %v350, 0.16666667
        %v415 = vmul.f32 %v351, 0.16666667
        %v416 = vmul.f32 %v352, 0.16666667
        %v417 = vmul.f32 %v353, 0.16666667
        %v418 = vmul.f32 %v354, 0.16666667
        %v419 = vmul.f32 %v355, 0.16666667
        %v420 = vmul.f32 %v356, 0.16666667
        %v421 = vmul.f32 %v357, 0.16666667
        %v422 = vmul.f32 %v358, 0.16666667
        %v423 = vmul.f32 %v359, 0.16666667
        %v424 = vmul.f32 %v360, 0.16666667
        %v425 = vmul.f32 %v361, 0.16666667
        %v426 = vmul.f32 %v362, 0.16666667
        %v427 = vmul.f32 %v363, 0.16666667
        %v428 = vmul.f32 %v364, 0.16666667
        %v429 = vmul.f32 %v365, 0.16666667
        %v430 = vmul.f32 %v366, 0.16666667
        %v431 = vmul.f32 %v367, 0.16666667
        %v432 = vmul.f32 %v368, 0.16666667
        %v433 = vmul.f32 %v369, 0.16666667
        %v434 = vmul.f32 %v370, 0.16666667
        %v435 = vmul.f32 %v371, 0.16666667
        %v436 = vmul.f32 %v372, 0.16666667
        %v437 = vmul.f32 %v373, 0.16666667
        %v438 = vmul.f32 %v374, 0.16666667
        %v439 = vmul.f32 %v375, 0.16666667
        %v440 = vmul.f32 %v376, 0.16666667
        %v441 = vmul.f32 %v377, 0.16666667
        %v442 = vmul.f32 %v378, 0.16666667
        %v443 = vmul.f32 %v379, 0.16666667
        %v444 = vmul.f32 %v380, 0.16666667
        %v445 = vmul.f32 %v381, 0.16666667
        %v446 = vmul.f32 %v382, 0.16666667
        %v447 = vmul.f32 %v383, 0.16666667
        %v448 = vmul.f32 %v384, 0.16666667
        %v449 = vmul.f32 %v385, 0.16666667
        %v450 = vmul.f32 %v386, 0.16666667
        %v451 = vmul.f32 %v387, 0.16666667
        %v452 = vmul.f32 %v388, 0.16666667
        %v453 = vmul.f32 %v389, 0.16666667
        %v454 = vmul.f32 %v390, 0.16666667
        %v455 = vmul.f32 %v391, 0.16666667
        %v456 = vmul.f32 %v392, 0.16666667
        %v457 = vmul.f32 %v393, 0.16666667
        %v458 = vmul.f32 %v138, %v394
        %v459 = vmul.f32 %v139, %v395
        %v460 = vmul.f32 %v140, %v396
        %v461 = vmul.f32 %v141, %v397
        %v462 = vmul.f32 %v142, %v398
        %v463 = vmul.f32 %v143, %v399
        %v464 = vmul.f32 %v144, %v400
        %v465 = vmul.f32 %v145, %v401
        %v466 = vmul.f32 %v146, %v402
        %v467 = vmul.f32 %v147, %v403
        %v468 = vmul.f32 %v148, %v404
        %v469 = vmul.f32 %v149, %v405
        %v470 = vmul.f32 %v150, %v406
        %v471 = vmul.f32 %v151, %v407
        %v472 = vmul.f32 %v152, %v408
        %v473 = vmul.f32 %v153, %v409
        %v474 = vmul.f32 %v154, %v410
        %v475 = vmul.f32 %v155, %v411
        %v476 = vmul.f32 %v156, %v412
        %v477 = vmul.f32 %v157, %v413
        %v478 = vmul.f32 %v158, %v414
        %v479 = vmul.f32 %v159, %v415
        %v480 = vmul.f32 %v160, %v416
        %v481 = vmul.f32 %v161, %v417
        %v482 = vmul.f32 %v162, %v418
        %v483 = vmul.f32 %v163, %v419
        %v484 = vmul.f32 %v164, %v420
        %v485 = vmul.f32 %v165, %v421
        %v486 = vmul.f32 %v166, %v422
        %v487 = vmul.f32 %v167, %v423
        %v488 = vmul.f32 %v168, %v424
        %v489 = vmul.f32 %v169, %v425
        %v490 = vmul.f32 %v170, %v426
        %v491 = vmul.f32 %v171, %v427
        %v492 = vmul.f32 %v172, %v428
        %v493 = vmul.f32 %v173, %v429
        %v494 = vmul.f32 %v174, %v430
        %v495 = vmul.f32 %v175, %v431
        %v496 = vmul.f32 %v176, %v432
        %v497 = vmul.f32 %v177, %v433
        %v498 = vmul.f32 %v178, %v434
        %v499 = vmul.f32 %v179, %v435
        %v500 = vmul.f32 %v180, %v436
        %v501 = vmul.f32 %v181, %v437
        %v502 = vmul.f32 %v182, %v438
        %v503 = vmul.f32 %v183, %v439
        %v504 = vmul.f32 %v184, %v440
        %v505 = vmul.f32 %v185, %v441
        %v506 = vmul.f32 %v186, %v442
        %v507 = vmul.f32 %v187, %v443
        %v508 = vmul.f32 %v188, %v444
        %v509 = vmul.f32 %v189, %v445
        %v510 = vmul.f32 %v190, %v446
        %v511 = vmul.f32 %v191, %v447
        %v512 = vmul.f32 %v192, %v448
        %v513 = vmul.f32 %v193, %v449
        %v514 = vmul.f32 %v194, %v450
        %v515 = vmul.f32 %v195, %v451
        %v516 = vmul.f32 %v196, %v452
        %v517 = vmul.f32 %v197, %v453
        %v518 = vmul.f32 %v198, %v454
        %v519 = vmul.f32 %v199, %v455
        %v520 = vmul.f32 %v200, %v456
        %v521 = vmul.f32 %v201, %v457
        %522 = vst [vmem:[%s135] sm:$0xff] %v458
        %523 = vst [vmem:[%s135 + $0x8] sm:$0xff] %v459
        %524 = vst [vmem:[%s135 + $0x10] sm:$0xff] %v460
        %525 = vst [vmem:[%s135 + $0x18] sm:$0xff] %v461
        %526 = vst [vmem:[%s135 + $0x20] sm:$0xff] %v462
        %527 = vst [vmem:[%s135 + $0x28] sm:$0xff] %v463
        %528 = vst [vmem:[%s135 + $0x30] sm:$0xff] %v464
        %529 = vst [vmem:[%s135 + $0x38] sm:$0xff] %v465
        %530 = vst [vmem:[%s135 + $0x40] sm:$0xff] %v466
        %531 = vst [vmem:[%s135 + $0x48] sm:$0xff] %v467
        %532 = vst [vmem:[%s135 + $0x50] sm:$0xff] %v468
        %533 = vst [vmem:[%s135 + $0x58] sm:$0xff] %v469
        %534 = vst [vmem:[%s135 + $0x60] sm:$0xff] %v470
        %535 = vst [vmem:[%s135 + $0x68] sm:$0xff] %v471
        %536 = vst [vmem:[%s135 + $0x70] sm:$0xff] %v472
        %537 = vst [vmem:[%s135 + $0x78] sm:$0xff] %v473
        %538 = vst [vmem:[%s135 + $0x80] sm:$0xff] %v474
        %539 = vst [vmem:[%s135 + $0x88] sm:$0xff] %v475
        %540 = vst [vmem:[%s135 + $0x90] sm:$0xff] %v476
        %541 = vst [vmem:[%s135 + $0x98] sm:$0xff] %v477
        %542 = vst [vmem:[%s135 + $0xa0] sm:$0xff] %v478
        %543 = vst [vmem:[%s135 + $0xa8] sm:$0xff] %v479
        %544 = vst [vmem:[%s135 + $0xb0] sm:$0xff] %v480
        %545 = vst [vmem:[%s135 + $0xb8] sm:$0xff] %v481
        %546 = vst [vmem:[%s135 + $0xc0] sm:$0xff] %v482
        %547 = vst [vmem:[%s135 + $0xc8] sm:$0xff] %v483
        %548 = vst [vmem:[%s135 + $0xd0] sm:$0xff] %v484
        %549 = vst [vmem:[%s135 + $0xd8] sm:$0xff] %v485
        %550 = vst [vmem:[%s135 + $0xe0] sm:$0xff] %v486
        %551 = vst [vmem:[%s135 + $0xe8] sm:$0xff] %v487
        %552 = vst [vmem:[%s135 + $0xf0] sm:$0xff] %v488
        %553 = vst [vmem:[%s135 + $0xf8] sm:$0xff] %v489
        %554 = vst [vmem:[%s135 + $0x100] sm:$0xff] %v490
        %555 = vst [vmem:[%s135 + $0x108] sm:$0xff] %v491
        %556 = vst [vmem:[%s135 + $0x110] sm:$0xff] %v492
        %557 = vst [vmem:[%s135 + $0x118] sm:$0xff] %v493
        %558 = vst [vmem:[%s135 + $0x120] sm:$0xff] %v494
        %559 = vst [vmem:[%s135 + $0x128] sm:$0xff] %v495
        %560 = vst [vmem:[%s135 + $0x130] sm:$0xff] %v496
        %561 = vst [vmem:[%s135 + $0x138] sm:$0xff] %v497
        %562 = vst [vmem:[%s135 + $0x140] sm:$0xff] %v498
        %563 = vst [vmem:[%s135 + $0x148] sm:$0xff] %v499
        %564 = vst [vmem:[%s135 + $0x150] sm:$0xff] %v500
        %565 = vst [vmem:[%s135 + $0x158] sm:$0xff] %v501
        %566 = vst [vmem:[%s135 + $0x160] sm:$0xff] %v502
        %567 = vst [vmem:[%s135 + $0x168] sm:$0xff] %v503
        %568 = vst [vmem:[%s135 + $0x170] sm:$0xff] %v504
        %569 = vst [vmem:[%s135 + $0x178] sm:$0xff] %v505
        %570 = vst [vmem:[%s135 + $0x180] sm:$0xff] %v506
        %571 = vst [vmem:[%s135 + $0x188] sm:$0xff] %v507
        %572 = vst [vmem:[%s135 + $0x190] sm:$0xff] %v508
        %573 = vst [vmem:[%s135 + $0x198] sm:$0xff] %v509
        %574 = vst [vmem:[%s135 + $0x1a0] sm:$0xff] %v510
        %575 = vst [vmem:[%s135 + $0x1a8] sm:$0xff] %v511
        %576 = vst [vmem:[%s135 + $0x1b0] sm:$0xff] %v512
        %577 = vst [vmem:[%s135 + $0x1b8] sm:$0xff] %v513
        %578 = vst [vmem:[%s135 + $0x1c0] sm:$0xff] %v514
        %579 = vst [vmem:[%s135 + $0x1c8] sm:$0xff] %v515
        %580 = vst [vmem:[%s135 + $0x1d0] sm:$0xff] %v516
        %581 = vst [vmem:[%s135 + $0x1d8] sm:$0xff] %v517
        %582 = vst [vmem:[%s135 + $0x1e0] sm:$0xff] %v518
        %583 = vst [vmem:[%s135 + $0x1e8] sm:$0xff] %v519
        %584 = vst [vmem:[%s135 + $0x1f0] sm:$0xff] %v520
        %585 = vst [vmem:[%s135 + $0x1f8] sm:$0xff] %v521
        %s586 = sand.u32 %s52, 1
        %s587 = scalar_lea.sflag [#allocation4], %s586
        %s588 = sand.u32 %s52, 1
        %s589 = smul.addr %s588, 512
        %s590 = scalar_lea.vmem [#allocation5], %s589
        // Predicated region
        $region29: #{tpu_custom_call.1} parent=23 // pred_check
          %p591 = pneg %p62
        $region30: #{tpu_custom_call.1} parent=23 // pred_check_branch
          %593 = sbr.rel (%p591) target = $region32
        $region31: #{tpu_custom_call.1} parent=23 // pred_region
          %s594 = smul.u32 2, %s18
          %s596 = ssub.s32 8192, 8192
          %597 = vsyncadd %s587, %s596
          %s598 = smul.addr %s594, 32
          %s599 = smul.addr %s598, 128
          %s600 = scalar_lea.hbm %s1, %s599
          %s601 = sshll.u32 %s590, 4
          %s602 = int_to_ptr.vmem [resolvable:$true] %s601
          %607 = dma.vmem_to_hbm [thread:$0]  %s602, 8192, %s600, %s587, 4096, 4096, 256
        $region32: #{tpu_custom_call.1} parent=23 // pred_fallthru
          _
      $region24: #{tpu_custom_call.1} parent=5 // pred_fallthru
        _
      %p608 = scmp.le.s32.totalorder 2, %s13
      // Predicated region
      $region33: #{tpu_custom_call.1} parent=5 // pred_check
        %p609 = pneg %p608
      $region34: #{tpu_custom_call.1} parent=5 // pred_check_branch
        %611 = sbr.rel (%p609) target = $region36
      $region35: #{tpu_custom_call.1} parent=5 // pred_region
        %s612 = ssub.s32 %s13, 2
        // Predicated region
        $region37: #{tpu_custom_call.1} parent=35 // pred_check
          %p613 = pneg %p68
        $region38: #{tpu_custom_call.1} parent=35 // pred_check_branch
          %615 = sbr.rel (%p613) target = $region40
        $region39: #{tpu_custom_call.1} parent=35 // pred_region
          %s616 = sand.u32 %s53, 1
          %s617 = scalar_lea.sflag [#allocation4], %s616
          %s618 = sand.u32 %s53, 1
          %s619 = smul.addr %s618, 512
          %s620 = scalar_lea.vmem [#allocation5], %s619
          %621 = dma.done %s617, 8192
        $region40: #{tpu_custom_call.1} parent=35 // pred_fallthru
          _
      $region36: #{tpu_custom_call.1} parent=5 // pred_fallthru
        _
    $region6: #{tpu_custom_call.1} parent=1 // loop_footer
      %s17 = sadd.s32 1, %s13
    $region7: #{tpu_custom_call.1} parent=1 // loop_footer_branch
      %12 = sbr.rel target = $region3
    $region8: #{tpu_custom_call.1} parent=1 // loop_exit
      _
    %622 = vsyncpa [#allocation3], 1
    %s623 = scalar_lea.sflag [#allocation3], 1
    %624 = vsyncpa %s623, 1
    %625 = vsyncpa [#allocation4], 1
    %s626 = scalar_lea.sflag [#allocation4], 1
    %627 = vsyncpa %s626, 1

</llo_original>
